<compile_context>
chip_gen: v7x
topology: tpu7x:2x2x1
jax: 0.10.0
libtpu: 0.0.40
codegen_flags: <defaults>
</compile_context>

<pallas_src>
from functools import partial

import jax
import jax.numpy as jnp
from jax.experimental import pallas as pl
from jax.experimental.pallas import tpu as pltpu


def conv1x1_sigmoid_kernel(x_ref, w_ref, b_ref, o_ref):
    # x_ref: (TILE_M, Cin) f32   w_ref: (Cin, Cout) bf16   b_ref: (1, Cout) f32
    # o_ref: (TILE_M, Cout) f32
    x_bf = x_ref[...].astype(jnp.bfloat16)  # cast folded into kernel (perf feedback #1)
    acc = jnp.dot(x_bf, w_ref[...], preferred_element_type=jnp.float32)
    o_ref[...] = jax.nn.sigmoid(acc + b_ref[...]).astype(o_ref.dtype)


def prepare_params(weight_oihw, bias):
    """One-time parameter prep (NOT on the forward path).

    weight_oihw: [Cout, Cin, 1, 1] f32  ->  (Cin, Cout) bf16  (lane-dense Cout)
    bias:        [Cout]            f32  ->  (1, Cout)   f32
    """
    cout, cin = weight_oihw.shape[0], weight_oihw.shape[1]
    w2d = jnp.asarray(weight_oihw.reshape(cout, cin).T, dtype=jnp.bfloat16)
    b2d = jnp.asarray(bias, dtype=jnp.float32).reshape(1, cout)
    return w2d, b2d


@partial(jax.jit, static_argnames=("tile_m",))
def conv2d_1x1_sigmoid(x_nchw, w2d, b2d, *, tile_m=512):
    """x_nchw: [N, Cin, H, W] f32; w2d: (Cin, Cout) bf16; b2d: (1, Cout) f32."""
    n, cin, h, w = x_nchw.shape
    cout = w2d.shape[1]
    m = n * h * w

    if h == 1 and w == 1:
        # Pure reshape: NCHW with H=W=1 is already (N, Cin) row-major.
        x2d = x_nchw.reshape(n, cin)
    else:
        # General fallback (unused for this module): channels last, then flatten rows.
        x2d = jnp.transpose(x_nchw, (0, 2, 3, 1)).reshape(m, cin)

    # Row tile: full array when tiny (block == full dims), else multiple-of-8 tile.
    tm = m if m <= tile_m else tile_m
    grid_m = pl.cdiv(m, tm)

    # Advisory cost so XLA's latency-hiding scheduler doesn't serialize around
    # an opaque custom call (perf feedback #3).
    cost = pl.CostEstimate(
        flops=2 * m * cin * cout,
        transcendentals=m * cout,
        bytes_accessed=m * cin * 4 + cin * cout * 2 + cout * 4 + m * cout * 4,
    )

    out2d = pl.pallas_call(
        conv1x1_sigmoid_kernel,
        out_shape=jax.ShapeDtypeStruct((m, cout), jnp.float32),
        grid=(grid_m,),
        in_specs=[
            pl.BlockSpec((tm, cin), lambda i: (i, 0)),      # activation rows
            pl.BlockSpec((cin, cout), lambda i: (0, 0)),    # full weight, resident
            pl.BlockSpec((1, cout), lambda i: (0, 0)),      # full bias, resident
        ],
        out_specs=pl.BlockSpec((tm, cout), lambda i: (i, 0)),
        compiler_params=pltpu.CompilerParams(dimension_semantics=("parallel",)),
        cost_estimate=cost,
    )(x2d, w2d, b2d)

    if h == 1 and w == 1:
        return out2d.reshape(n, cout, 1, 1)
    return jnp.transpose(out2d.reshape(n, h, w, cout), (0, 3, 1, 2))


if __name__ == "__main__":
    key = jax.random.PRNGKey(0)
    k_x, k_w, k_b = jax.random.split(key, 3)

    N, CIN, COUT, H, W = 1, 44, 1056, 1, 1

    # Deterministic parameter init (matches Conv2d default uniform bound 1/sqrt(fan_in)).
    bound = 1.0 / jnp.sqrt(jnp.float32(CIN * 1 * 1))
    weight = jax.random.uniform(k_w, (COUT, CIN, 1, 1), jnp.float32, -bound, bound)
    bias = jax.random.uniform(k_b, (COUT,), jnp.float32, -bound, bound)

    # Input like x377 = torch.randn([1, 44, 1, 1])
    x = jax.random.normal(k_x, (N, CIN, H, W), jnp.float32)

    # One-time parameter prep (hoisted out of the forward path).
    w2d, b2d = prepare_params(weight, bias)

    out = conv2d_1x1_sigmoid(x, w2d, b2d)
    out = jax.block_until_ready(out)

    # Reference: original-module semantics in full f32.
    ref = jax.nn.sigmoid(
        jnp.einsum("nchw,oc->nohw", x, weight.reshape(COUT, CIN))
        + bias.reshape(1, COUT, 1, 1)
    )
    assert out.shape == (N, COUT, H, W)
    # bf16 weight/activation feeding the MXU with f32 accumulate: pre-activation error
    # <~1e-2, sigmoid slope <= 0.25 -> output error well under 1e-2.
    assert jnp.allclose(out, ref, atol=1e-2, rtol=1e-2), float(
        jnp.max(jnp.abs(out - ref))
    )

    print("KERNEL_OK")
</pallas_src>

<mosaic_0001>
module attributes {stable_mosaic.version = 11 : i64} {
  func.func @conv1x1_sigmoid_kernel(%arg0: i32, %arg1: memref<1x44xf32, #tpu.memory_space<vmem>>, %arg2: memref<44x1056xbf16, #tpu.memory_space<vmem>>, %arg3: memref<1x1056xf32, #tpu.memory_space<vmem>>, %arg4: memref<1x1056xf32, #tpu.memory_space<vmem>>) attributes {dimension_semantics = [#tpu.dimension_semantics<parallel>], iteration_bounds = array<i64: 1>, scalar_prefetch = 0 : i64, scratch_operands = 0 : i64, tpu.core_type = #tpu.core_type<tc>, window_params = [{transform_indices = @transform_0, window_bounds = array<i64: 1, 44>}, {pipeline_mode = #tpu.pipeline_mode<synchronous>, transform_indices = @transform_1, window_bounds = array<i64: 44, 1056>}, {pipeline_mode = #tpu.pipeline_mode<synchronous>, transform_indices = @transform_2, window_bounds = array<i64: 1, 1056>}, {transform_indices = @transform_3, window_bounds = array<i64: 1, 1056>}]} {
    %c0 = arith.constant 0 : index
    %c0_0 = arith.constant 0 : index
    %0 = vector.load %arg1[%c0, %c0_0] : memref<1x44xf32, #tpu.memory_space<vmem>>, vector<1x44xf32>
    %1 = arith.truncf %0 : vector<1x44xf32> to vector<1x44xbf16>
    %c0_1 = arith.constant 0 : index
    %c0_2 = arith.constant 0 : index
    %2 = vector.load %arg2[%c0_1, %c0_2] : memref<44x1056xbf16, #tpu.memory_space<vmem>>, vector<44x1056xbf16>
    %cst = arith.constant dense<0.000000e+00> : vector<1x1056xf32>
    %3 = tpu.matmul %1, %2, %cst {dimension_numbers = #tpu.dot_dimension_numbers<[1], [0], [0], [1], [0, 0, 1, 1], [], []>} : vector<1x44xbf16>, vector<44x1056xbf16>, vector<1x1056xf32> -> vector<1x1056xf32>
    %c0_3 = arith.constant 0 : index
    %c0_4 = arith.constant 0 : index
    %4 = vector.load %arg3[%c0_3, %c0_4] : memref<1x1056xf32, #tpu.memory_space<vmem>>, vector<1x1056xf32>
    %5 = arith.addf %3, %4 : vector<1x1056xf32>
    %6 = arith.negf %5 : vector<1x1056xf32>
    %7 = math.exp %6 : vector<1x1056xf32>
    %cst_5 = arith.constant 1.000000e+00 : f32
    %8 = vector.broadcast %cst_5 : f32 to vector<1x1056xf32>
    %9 = arith.addf %8, %7 : vector<1x1056xf32>
    %10 = arith.divf %8, %9 : vector<1x1056xf32>
    %c0_6 = arith.constant 0 : index
    %c0_7 = arith.constant 0 : index
    %11 = vector.load %arg4[%c0_6, %c0_7] : memref<1x1056xf32, #tpu.memory_space<vmem>>, vector<1x1056xf32>
    tpu.vector_store %arg4[%c0_6, %c0_7], %10 {strides = array<i32>} : memref<1x1056xf32, #tpu.memory_space<vmem>>, vector<1x1056xf32>,
    return
  }
  func.func @transform_0(%arg0: i32) -> (i32, i32) {
    %c0_i32 = arith.constant 0 : i32
    %c0_i32_0 = arith.constant 0 : i32
    return %arg0, %c0_i32 : i32, i32
  }
  func.func @transform_1(%arg0: i32) -> (i32, i32) {
    %c0_i32 = arith.constant 0 : i32
    %c0_i32_0 = arith.constant 0 : i32
    %c0_i32_1 = arith.constant 0 : i32
    return %c0_i32, %c0_i32_0 : i32, i32
  }
  func.func @transform_2(%arg0: i32) -> (i32, i32) {
    %c0_i32 = arith.constant 0 : i32
    %c0_i32_0 = arith.constant 0 : i32
    %c0_i32_1 = arith.constant 0 : i32
    return %c0_i32, %c0_i32_0 : i32, i32
  }
  func.func @transform_3(%arg0: i32) -> (i32, i32) {
    %c0_i32 = arith.constant 0 : i32
    %c0_i32_0 = arith.constant 0 : i32
    return %arg0, %c0_i32 : i32, i32
  }
}

</mosaic_0001>

<llo_original>
// kernel: conv2d_1x1_sigmoid.1
$region0: #{conv2d_1x1_sigmoid.1}
  #allocation0 [shape = 'u32[]', space=smem, size = 0x4, offset = 0x4, fixed_abs, tag = 'smem constant byte address 0x4 - core index']
  #allocation1 [shape = 'u32[144,128]{1,0:T(1,128)}', space=vmem, size = 0x12000, scoped, tag = 'internal scratch']
  %s0 = inlined_call_operand.vmem [shape: f32[1,44], index: 0, kind: input, shape index: {}]
  %s1 = inlined_call_operand.hbm [shape: bf16[44,1056], index: 1, kind: input, shape index: {}]
  %s2 = inlined_call_operand.vmem [shape: f32[1,1056], index: 2, kind: input, shape index: {}]
  %s3 = inlined_call_operand.hbm [shape: f32[1,1056], index: 3, kind: output, shape index: {}]
  %s4 = sld [smem:[#allocation0]]
  $region26: #{conv2d_1x1_sigmoid.1} parent=0
    _
  %s6 = ssub.s32 1, %s4
  %s7 = scalar_select 0, %s6, %s4
  $region1: #{conv2d_1x1_sigmoid.1} parent=0
    #allocation2 [shape = 'u8[110592]{0}', space=vmem, size = 0x1b000, scoped, tag = 'input window, operand 1, single buffered']
    #allocation3 [shape = 's32[1]{0}', space=sflag, size = 0x4, scoped, tag = 'scoped memory for conv2d_1x1_sigmoid.1']
    #allocation4 [shape = 's32[1]{0}', space=sflag, size = 0x4, scoped, tag = 'scoped memory for conv2d_1x1_sigmoid.1']
    #allocation5 [shape = 'u8[4608]{0}', space=vmem, size = 0x1400, scoped, tag = 'output window, operand 0, single buffered']
    %8 = vsyncpa [#allocation3], 0
    %9 = vsyncpa [#allocation4], 0
    // Predicated region
    $region2: #{conv2d_1x1_sigmoid.1} parent=1 // pred_check
      _
    $region3: #{conv2d_1x1_sigmoid.1} parent=1 // pred_check_branch
      %11 = sbr.rel (0) target = $region5
    $region4: #{conv2d_1x1_sigmoid.1} parent=1 // pred_region
      _
    $region5: #{conv2d_1x1_sigmoid.1} parent=1 // pred_fallthru
      _
    // Predicated region
    $region6: #{conv2d_1x1_sigmoid.1} parent=1 // pred_check
      _
    $region7: #{conv2d_1x1_sigmoid.1} parent=1 // pred_check_branch
      %13 = sbr.rel (0) target = $region9
    $region8: #{conv2d_1x1_sigmoid.1} parent=1 // pred_region
      %s15 = ssub.s32 3456, 3456
      %16 = vsyncadd [#allocation3], %s15
      %s17 = sshll.u32 [#allocation2], 4
      %s18 = int_to_ptr.vmem [resolvable:$true] %s17
      %23 = dma.hbm_to_vmem [thread:$0]  %s1, 3456, %s18, [#allocation3], 576, 576, 36
    $region9: #{conv2d_1x1_sigmoid.1} parent=1 // pred_fallthru
      _
    // Predicated region
    $region10: #{conv2d_1x1_sigmoid.1} parent=1 // pred_check
      _
    $region11: #{conv2d_1x1_sigmoid.1} parent=1 // pred_check_branch
      %25 = sbr.rel (0) target = $region13
    $region12: #{conv2d_1x1_sigmoid.1} parent=1 // pred_region
      _
    $region13: #{conv2d_1x1_sigmoid.1} parent=1 // pred_fallthru
      _
    // Predicated region
    $region14: #{conv2d_1x1_sigmoid.1} parent=1 // pred_check
      _
    $region15: #{conv2d_1x1_sigmoid.1} parent=1 // pred_check_branch
      %27 = sbr.rel (0) target = $region17
    $region16: #{conv2d_1x1_sigmoid.1} parent=1 // pred_region
      %28 = dma.done [#allocation3], 3456
    $region17: #{conv2d_1x1_sigmoid.1} parent=1 // pred_fallthru
      _
    %v30 = vld [vmem:[%s0] sm:$0x1]
    %v31 = vpack.c.bf16 %v30, %v30
    %v32 = vld [vmem:[#allocation2] sm:$0xff]
    %v33 = vld [vmem:[#allocation2 + $0x8] sm:$0xff]
    %v34 = vld [vmem:[#allocation2 + $0x10] sm:$0xff]
    %v35 = vld [vmem:[#allocation2 + $0x18] sm:$0xff]
    %v36 = vld [vmem:[#allocation2 + $0x20] sm:$0xf]
    %v37 = vld [vmem:[#allocation2 + $0x24] sm:$0xff]
    %v38 = vld [vmem:[#allocation2 + $0x2c] sm:$0xff]
    %v39 = vld [vmem:[#allocation2 + $0x34] sm:$0xff]
    %v40 = vld [vmem:[#allocation2 + $0x3c] sm:$0xff]
    %v41 = vld [vmem:[#allocation2 + $0x44] sm:$0xf]
    %v42 = vld [vmem:[#allocation2 + $0x48] sm:$0xff]
    %v43 = vld [vmem:[#allocation2 + $0x50] sm:$0xff]
    %v44 = vld [vmem:[#allocation2 + $0x58] sm:$0xff]
    %v45 = vld [vmem:[#allocation2 + $0x60] sm:$0xff]
    %v46 = vld [vmem:[#allocation2 + $0x68] sm:$0xf]
    %v47 = vld [vmem:[#allocation2 + $0x6c] sm:$0xff]
    %v48 = vld [vmem:[#allocation2 + $0x74] sm:$0xff]
    %v49 = vld [vmem:[#allocation2 + $0x7c] sm:$0xff]
    %v50 = vld [vmem:[#allocation2 + $0x84] sm:$0xff]
    %v51 = vld [vmem:[#allocation2 + $0x8c] sm:$0xf]
    %v52 = vld [vmem:[#allocation2 + $0x90] sm:$0xff]
    %v53 = vld [vmem:[#allocation2 + $0x98] sm:$0xff]
    %v54 = vld [vmem:[#allocation2 + $0xa0] sm:$0xff]
    %v55 = vld [vmem:[#allocation2 + $0xa8] sm:$0xff]
    %v56 = vld [vmem:[#allocation2 + $0xb0] sm:$0xf]
    %v57 = vld [vmem:[#allocation2 + $0xb4] sm:$0x33]
    %v58 = vld [vmem:[#allocation2 + $0xbc] sm:$0x33]
    %v59 = vld [vmem:[#allocation2 + $0xc4] sm:$0x33]
    %v60 = vld [vmem:[#allocation2 + $0xcc] sm:$0x33]
    %v61 = vld [vmem:[#allocation2 + $0xd4] sm:$0x3]
    %v62 = vld [vmem:[%s2] sm:$0xff]
    %v63 = vld [vmem:[%s2 + $0x8] sm:$0x1]
    %v94 = vunpack.c.l.b16 %v32
    %v95 = vunpack.c.h.b16 %v32
    %v96 = vunpack.c.l.b16 %v33
    %v97 = vunpack.c.h.b16 %v33
    %v98 = vunpack.c.l.b16 %v34
    %v99 = vunpack.c.h.b16 %v34
    %v100 = vunpack.c.l.b16 %v35
    %v101 = vunpack.c.h.b16 %v35
    %v102 = vunpack.c.l.b16 %v36
    %v103 = vunpack.c.l.b16 %v37
    %v104 = vunpack.c.h.b16 %v37
    %v105 = vunpack.c.l.b16 %v38
    %v106 = vunpack.c.h.b16 %v38
    %v107 = vunpack.c.l.b16 %v39
    %v108 = vunpack.c.h.b16 %v39
    %v109 = vunpack.c.l.b16 %v40
    %v110 = vunpack.c.h.b16 %v40
    %v111 = vunpack.c.l.b16 %v41
    %v112 = vunpack.c.l.b16 %v42
    %v113 = vunpack.c.h.b16 %v42
    %v114 = vunpack.c.l.b16 %v43
    %v115 = vunpack.c.h.b16 %v43
    %v116 = vunpack.c.l.b16 %v44
    %v117 = vunpack.c.h.b16 %v44
    %v118 = vunpack.c.l.b16 %v45
    %v119 = vunpack.c.h.b16 %v45
    %v120 = vunpack.c.l.b16 %v46
    %v121 = vunpack.c.l.b16 %v47
    %v122 = vunpack.c.h.b16 %v47
    %v123 = vunpack.c.l.b16 %v48
    %v124 = vunpack.c.h.b16 %v48
    %v125 = vunpack.c.l.b16 %v49
    %v126 = vunpack.c.h.b16 %v49
    %v127 = vunpack.c.l.b16 %v50
    %v128 = vunpack.c.h.b16 %v50
    %v129 = vunpack.c.l.b16 %v51
    %v130 = vunpack.c.l.b16 %v52
    %v131 = vunpack.c.h.b16 %v52
    %v132 = vunpack.c.l.b16 %v53
    %v133 = vunpack.c.h.b16 %v53
    %v134 = vunpack.c.l.b16 %v54
    %v135 = vunpack.c.h.b16 %v54
    %v136 = vunpack.c.l.b16 %v55
    %v137 = vunpack.c.h.b16 %v55
    %v138 = vunpack.c.l.b16 %v56
    %v139 = vunpack.c.l.b16 %v57
    %v140 = vunpack.c.h.b16 %v57
    %v141 = vunpack.c.l.b16 %v58
    %v142 = vunpack.c.h.b16 %v58
    %v143 = vunpack.c.l.b16 %v59
    %v144 = vunpack.c.h.b16 %v59
    %v145 = vunpack.c.l.b16 %v60
    %v146 = vunpack.c.h.b16 %v60
    %v147 = vunpack.c.l.b16 %v61
    %v148 = vpack.c.b16 %v103, %v94
    %v149 = vpack.c.b16 %v104, %v95
    %v150 = vpack.c.b16 %v105, %v96
    %v151 = vpack.c.b16 %v106, %v97
    %v152 = vpack.c.b16 %v107, %v98
    %v153 = vpack.c.b16 %v108, %v99
    %v154 = vpack.c.b16 %v109, %v100
    %v155 = vpack.c.b16 %v110, %v101
    %v156 = vpack.c.b16 %v111, %v102
    %v157 = vpack.c.b16 %v121, %v112
    %v158 = vpack.c.b16 %v122, %v113
    %v159 = vpack.c.b16 %v123, %v114
    %v160 = vpack.c.b16 %v124, %v115
    %v161 = vpack.c.b16 %v125, %v116
    %v162 = vpack.c.b16 %v126, %v117
    %v163 = vpack.c.b16 %v127, %v118
    %v164 = vpack.c.b16 %v128, %v119
    %v165 = vpack.c.b16 %v129, %v120
    %v166 = vpack.c.b16 %v139, %v130
    %v167 = vpack.c.b16 %v140, %v131
    %v168 = vpack.c.b16 %v141, %v132
    %v169 = vpack.c.b16 %v142, %v133
    %v170 = vpack.c.b16 %v143, %v134
    %v171 = vpack.c.b16 %v144, %v135
    %v172 = vpack.c.b16 %v145, %v136
    %v173 = vpack.c.b16 %v146, %v137
    %v174 = vpack.c.b16 %v147, %v138
    %v195 = vlaneseq
    %v196 = vshrl.u32 %v195, 7
    %v197 = vsub.s32 0, %v196
    %v198 = vrot.slane %v62, %v197
    %v199 = vlaneseq
    %v200 = vshrl.u32 %v199, 7
    %v201 = vsub.s32 1, %v200
    %v202 = vrot.slane %v62, %v201
    %v203 = vlaneseq
    %v204 = vshrl.u32 %v203, 7
    %v205 = vsub.s32 2, %v204
    %v206 = vrot.slane %v62, %v205
    %v207 = vlaneseq
    %v208 = vshrl.u32 %v207, 7
    %v209 = vsub.s32 3, %v208
    %v210 = vrot.slane %v62, %v209
    %v211 = vlaneseq
    %v212 = vshrl.u32 %v211, 7
    %v213 = vsub.s32 4, %v212
    %v214 = vrot.slane %v62, %v213
    %v215 = vlaneseq
    %v216 = vshrl.u32 %v215, 7
    %v217 = vsub.s32 5, %v216
    %v218 = vrot.slane %v62, %v217
    %v219 = vlaneseq
    %v220 = vshrl.u32 %v219, 7
    %v221 = vsub.s32 6, %v220
    %v222 = vrot.slane %v62, %v221
    %v223 = vlaneseq
    %v224 = vshrl.u32 %v223, 7
    %v225 = vsub.s32 7, %v224
    %v226 = vrot.slane %v62, %v225
    %v227 = vlaneseq
    %v228 = vshrl.u32 %v227, 7
    %v229 = vsub.s32 0, %v228
    %v230 = vrot.slane %v63, %v229
    %vm240 = vcmask 359424
    %v242 = vsel %vm240, %v31, 0
    %vm244 = vcmask 1045504
    %v246 = vsel %vm244, %v166, 0
    %v249 = vsel %vm244, %v167, 0
    %v252 = vsel %vm244, %v168, 0
    %v255 = vsel %vm244, %v169, 0
    %v258 = vsel %vm244, %v170, 0
    %v261 = vsel %vm244, %v171, 0
    %v264 = vsel %vm244, %v172, 0
    %v267 = vsel %vm244, %v173, 0
    %v270 = vsel %vm244, %v174, 0
    %272 = vmatprep.subr.bf16.mxu0 %v149
    %273 = vmatpush1.bf16.msra.mxu0 %v148
    %274 = vmatprep.subr.bf16.mxu0 %v158
    %275 = vmatpush1.bf16.msra.mxu0 %v157
    %276 = vmatprep.subr.bf16.mxu0 %v249
    %277 = vmatpush1.bf16.msra.mxu0 %v246
    %278 = vmatprep.subr.bf16.mxu0 0
    %279 = vmatpush1.bf16.msra.mxu0 0
    %280 = vmatprep.subr.bf16.mxu0 0
    %281 = vmatpush1.bf16.msra.mxu0 0
    %282 = vmatprep.subr.bf16.mxu0 0
    %283 = vmatpush1.bf16.msra.mxu0 0
    %284 = vmatprep.subr.bf16.mxu0 0
    %285 = vmatpush1.bf16.msra.mxu0 0
    %286 = vmatprep.subr.bf16.mxu0 0
    %287 = vmatpush1.bf16.msra.mxu0 0
    %288 = vmatprep.subr.bf16.mxu0 0
    %289 = vmatpush1.bf16.msra.mxu0 0
    %290 = vmatprep.subr.bf16.mxu0 0
    %291 = vmatpush1.bf16.msra.mxu0 0
    %292 = vmatprep.subr.bf16.mxu0 0
    %293 = vmatpush1.bf16.msra.mxu0 0
    %294 = vmatprep.subr.bf16.mxu0 0
    %295 = vmatpush1.bf16.msra.mxu0 0
    %296 = vmatprep.subr.bf16.mxu0 0
    %297 = vmatpush1.bf16.msra.mxu0 0
    %298 = vmatprep.subr.bf16.mxu0 0
    %299 = vmatpush1.bf16.msra.mxu0 0
    %300 = vmatprep.subr.bf16.mxu0 0
    %301 = vmatpush1.bf16.msra.mxu0 0
    %302 = vmatprep.subr.bf16.mxu0 0
    %303 = vmatpush1.bf16.msra.mxu0 0
    %304 = vmatprep.mubr.bf16.mxu0 0
    %305 = vmatmul.mubr.bf16.gmra.mrb[0].mxu0 %v242
    %v306 = vpop.f32.mrb[0].mxu0
    %v307 = vadd.f32 %v198, %v306
    %v308 = vpop.f32.mrb[0].mxu0
    %v309 = vadd.f32 %v202, %v308
    %v310 = vpop.f32.mrb[0].mxu0
    %v311 = vpop.f32.mrb[0].mxu0
    %312 = vdwg.mxu0
    %313 = vmatprep.subr.bf16.mxu0 %v151
    %314 = vmatpush1.bf16.msra.mxu0 %v150
    %315 = vmatprep.subr.bf16.mxu0 %v160
    %316 = vmatpush1.bf16.msra.mxu0 %v159
    %317 = vmatprep.subr.bf16.mxu0 %v255
    %318 = vmatpush1.bf16.msra.mxu0 %v252
    %319 = vmatprep.subr.bf16.mxu0 0
    %320 = vmatpush1.bf16.msra.mxu0 0
    %321 = vmatprep.subr.bf16.mxu0 0
    %322 = vmatpush1.bf16.msra.mxu0 0
    %323 = vmatprep.subr.bf16.mxu0 0
    %324 = vmatpush1.bf16.msra.mxu0 0
    %325 = vmatprep.subr.bf16.mxu0 0
    %326 = vmatpush1.bf16.msra.mxu0 0
    %327 = vmatprep.subr.bf16.mxu0 0
    %328 = vmatpush1.bf16.msra.mxu0 0
    %329 = vmatprep.subr.bf16.mxu0 0
    %330 = vmatpush1.bf16.msra.mxu0 0
    %331 = vmatprep.subr.bf16.mxu0 0
    %332 = vmatpush1.bf16.msra.mxu0 0
    %333 = vmatprep.subr.bf16.mxu0 0
    %334 = vmatpush1.bf16.msra.mxu0 0
    %335 = vmatprep.subr.bf16.mxu0 0
    %336 = vmatpush1.bf16.msra.mxu0 0
    %337 = vmatprep.subr.bf16.mxu0 0
    %338 = vmatpush1.bf16.msra.mxu0 0
    %339 = vmatprep.subr.bf16.mxu0 0
    %340 = vmatpush1.bf16.msra.mxu0 0
    %341 = vmatprep.subr.bf16.mxu0 0
    %342 = vmatpush1.bf16.msra.mxu0 0
    %343 = vmatprep.subr.bf16.mxu0 0
    %344 = vmatpush1.bf16.msra.mxu0 0
    %345 = vmatprep.mubr.bf16.mxu0 0
    %346 = vmatmul.mubr.bf16.gmra.mrb[0].mxu0 %v242
    %v347 = vpop.f32.mrb[0].mxu0
    %v348 = vadd.f32 %v206, %v347
    %v349 = vpop.f32.mrb[0].mxu0
    %v350 = vadd.f32 %v210, %v349
    %v351 = vpop.f32.mrb[0].mxu0
    %v352 = vpop.f32.mrb[0].mxu0
    %353 = vdwg.mxu0
    %354 = vmatprep.subr.bf16.mxu0 %v153
    %355 = vmatpush1.bf16.msra.mxu0 %v152
    %356 = vmatprep.subr.bf16.mxu0 %v162
    %357 = vmatpush1.bf16.msra.mxu0 %v161
    %358 = vmatprep.subr.bf16.mxu0 %v261
    %359 = vmatpush1.bf16.msra.mxu0 %v258
    %360 = vmatprep.subr.bf16.mxu0 0
    %361 = vmatpush1.bf16.msra.mxu0 0
    %362 = vmatprep.subr.bf16.mxu0 0
    %363 = vmatpush1.bf16.msra.mxu0 0
    %364 = vmatprep.subr.bf16.mxu0 0
    %365 = vmatpush1.bf16.msra.mxu0 0
    %366 = vmatprep.subr.bf16.mxu0 0
    %367 = vmatpush1.bf16.msra.mxu0 0
    %368 = vmatprep.subr.bf16.mxu0 0
    %369 = vmatpush1.bf16.msra.mxu0 0
    %370 = vmatprep.subr.bf16.mxu0 0
    %371 = vmatpush1.bf16.msra.mxu0 0
    %372 = vmatprep.subr.bf16.mxu0 0
    %373 = vmatpush1.bf16.msra.mxu0 0
    %374 = vmatprep.subr.bf16.mxu0 0
    %375 = vmatpush1.bf16.msra.mxu0 0
    %376 = vmatprep.subr.bf16.mxu0 0
    %377 = vmatpush1.bf16.msra.mxu0 0
    %378 = vmatprep.subr.bf16.mxu0 0
    %379 = vmatpush1.bf16.msra.mxu0 0
    %380 = vmatprep.subr.bf16.mxu0 0
    %381 = vmatpush1.bf16.msra.mxu0 0
    %382 = vmatprep.subr.bf16.mxu0 0
    %383 = vmatpush1.bf16.msra.mxu0 0
    %384 = vmatprep.subr.bf16.mxu0 0
    %385 = vmatpush1.bf16.msra.mxu0 0
    %386 = vmatprep.mubr.bf16.mxu0 0
    %387 = vmatmul.mubr.bf16.gmra.mrb[0].mxu0 %v242
    %v388 = vpop.f32.mrb[0].mxu0
    %v389 = vadd.f32 %v214, %v388
    %v390 = vpop.f32.mrb[0].mxu0
    %v391 = vadd.f32 %v218, %v390
    %v392 = vpop.f32.mrb[0].mxu0
    %v393 = vpop.f32.mrb[0].mxu0
    %394 = vdwg.mxu0
    %395 = vmatprep.subr.bf16.mxu0 %v155
    %396 = vmatpush1.bf16.msra.mxu0 %v154
    %397 = vmatprep.subr.bf16.mxu0 %v164
    %398 = vmatpush1.bf16.msra.mxu0 %v163
    %399 = vmatprep.subr.bf16.mxu0 %v267
    %400 = vmatpush1.bf16.msra.mxu0 %v264
    %401 = vmatprep.subr.bf16.mxu0 0
    %402 = vmatpush1.bf16.msra.mxu0 0
    %403 = vmatprep.subr.bf16.mxu0 0
    %404 = vmatpush1.bf16.msra.mxu0 0
    %405 = vmatprep.subr.bf16.mxu0 0
    %406 = vmatpush1.bf16.msra.mxu0 0
    %407 = vmatprep.subr.bf16.mxu0 0
    %408 = vmatpush1.bf16.msra.mxu0 0
    %409 = vmatprep.subr.bf16.mxu0 0
    %410 = vmatpush1.bf16.msra.mxu0 0
    %411 = vmatprep.subr.bf16.mxu0 0
    %412 = vmatpush1.bf16.msra.mxu0 0
    %413 = vmatprep.subr.bf16.mxu0 0
    %414 = vmatpush1.bf16.msra.mxu0 0
    %415 = vmatprep.subr.bf16.mxu0 0
    %416 = vmatpush1.bf16.msra.mxu0 0
    %417 = vmatprep.subr.bf16.mxu0 0
    %418 = vmatpush1.bf16.msra.mxu0 0
    %419 = vmatprep.subr.bf16.mxu0 0
    %420 = vmatpush1.bf16.msra.mxu0 0
    %421 = vmatprep.subr.bf16.mxu0 0
    %422 = vmatpush1.bf16.msra.mxu0 0
    %423 = vmatprep.subr.bf16.mxu0 0
    %424 = vmatpush1.bf16.msra.mxu0 0
    %425 = vmatprep.subr.bf16.mxu0 0
    %426 = vmatpush1.bf16.msra.mxu0 0
    %427 = vmatprep.mubr.bf16.mxu0 0
    %428 = vmatmul.mubr.bf16.gmra.mrb[0].mxu0 %v242
    %v429 = vpop.f32.mrb[0].mxu0
    %v430 = vadd.f32 %v222, %v429
    %v431 = vpop.f32.mrb[0].mxu0
    %v432 = vadd.f32 %v226, %v431
    %v433 = vpop.f32.mrb[0].mxu0
    %v434 = vpop.f32.mrb[0].mxu0
    %435 = vdwg.mxu0
    %436 = vmatprep.subr.bf16.mxu0 0
    %437 = vmatpush1.bf16.msra.mxu0 %v156
    %438 = vmatprep.subr.bf16.mxu0 0
    %439 = vmatpush1.bf16.msra.mxu0 %v165
    %440 = vmatprep.subr.bf16.mxu0 0
    %441 = vmatpush1.bf16.msra.mxu0 %v270
    %442 = vmatprep.subr.bf16.mxu0 0
    %443 = vmatpush1.bf16.msra.mxu0 0
    %444 = vmatprep.subr.bf16.mxu0 0
    %445 = vmatpush1.bf16.msra.mxu0 0
    %446 = vmatprep.subr.bf16.mxu0 0
    %447 = vmatpush1.bf16.msra.mxu0 0
    %448 = vmatprep.subr.bf16.mxu0 0
    %449 = vmatpush1.bf16.msra.mxu0 0
    %450 = vmatprep.subr.bf16.mxu0 0
    %451 = vmatpush1.bf16.msra.mxu0 0
    %452 = vmatprep.subr.bf16.mxu0 0
    %453 = vmatpush1.bf16.msra.mxu0 0
    %454 = vmatprep.subr.bf16.mxu0 0
    %455 = vmatpush1.bf16.msra.mxu0 0
    %456 = vmatprep.subr.bf16.mxu0 0
    %457 = vmatpush1.bf16.msra.mxu0 0
    %458 = vmatprep.subr.bf16.mxu0 0
    %459 = vmatpush1.bf16.msra.mxu0 0
    %460 = vmatprep.subr.bf16.mxu0 0
    %461 = vmatpush1.bf16.msra.mxu0 0
    %462 = vmatprep.subr.bf16.mxu0 0
    %463 = vmatpush1.bf16.msra.mxu0 0
    %464 = vmatprep.subr.bf16.mxu0 0
    %465 = vmatpush1.bf16.msra.mxu0 0
    %466 = vmatprep.subr.bf16.mxu0 0
    %467 = vmatpush1.bf16.msra.mxu0 0
    %468 = vmatprep.mubr.bf16.mxu0 0
    %469 = vmatmul.mubr.bf16.gmra.mrb[0].mxu0 %v242
    %v470 = vpop.f32.mrb[0].mxu0
    %v471 = vadd.f32 %v230, %v470
    %v472 = vpop.f32.mrb[0].mxu0
    %v473 = vpop.f32.mrb[0].mxu0
    %v474 = vpop.f32.mrb[0].mxu0
    %475 = vdwg.mxu0
    %v476 = vxor.u32 %v307, 2147483648
    %v477 = vxor.u32 %v309, 2147483648
    %v478 = vxor.u32 %v348, 2147483648
    %v479 = vxor.u32 %v350, 2147483648
    %v480 = vxor.u32 %v389, 2147483648
    %v481 = vxor.u32 %v391, 2147483648
    %v482 = vxor.u32 %v430, 2147483648
    %v483 = vxor.u32 %v432, 2147483648
    %v484 = vxor.u32 %v471, 2147483648
    %v485 = vmul.f32 %v476, 1.442695
    %v486 = vpow.pop %v485
    %v487 = vmul.f32 %v477, 1.442695
    %v488 = vpow.pop %v487
    %v489 = vmul.f32 %v478, 1.442695
    %v490 = vpow.pop %v489
    %v491 = vmul.f32 %v479, 1.442695
    %v492 = vpow.pop %v491
    %v493 = vmul.f32 %v480, 1.442695
    %v494 = vpow.pop %v493
    %v495 = vmul.f32 %v481, 1.442695
    %v496 = vpow.pop %v495
    %v497 = vmul.f32 %v482, 1.442695
    %v498 = vpow.pop %v497
    %v499 = vmul.f32 %v483, 1.442695
    %v500 = vpow.pop %v499
    %v501 = vmul.f32 %v484, 1.442695
    %v502 = vpow.pop %v501
    %v503 = vadd.f32 %v486, 1.0
    %v504 = vadd.f32 %v488, 1.0
    %v505 = vadd.f32 %v490, 1.0
    %v506 = vadd.f32 %v492, 1.0
    %v507 = vadd.f32 %v494, 1.0
    %v508 = vadd.f32 %v496, 1.0
    %v509 = vadd.f32 %v498, 1.0
    %v510 = vadd.f32 %v500, 1.0
    %v511 = vadd.f32 %v502, 1.0
    %v512 = vrcp.pop %v503
    %v513 = vmul.f32 1.0, %v512
    %v514 = vrcp.pop %v504
    %v515 = vmul.f32 1.0, %v514
    %v516 = vrcp.pop %v505
    %v517 = vmul.f32 1.0, %v516
    %v518 = vrcp.pop %v506
    %v519 = vmul.f32 1.0, %v518
    %v520 = vrcp.pop %v507
    %v521 = vmul.f32 1.0, %v520
    %v522 = vrcp.pop %v508
    %v523 = vmul.f32 1.0, %v522
    %v524 = vrcp.pop %v509
    %v525 = vmul.f32 1.0, %v524
    %v526 = vrcp.pop %v510
    %v527 = vmul.f32 1.0, %v526
    %v528 = vrcp.pop %v511
    %v529 = vmul.f32 1.0, %v528
    %v539 = vcombine.low %v513, %v515
    %v540 = vcombine.low %v517, %v519
    %v541 = vcombine.low %v521, %v523
    %v542 = vcombine.low %v525, %v527
    %v544 = vunpack.c.l.s4 1966171168
    %v545 = vunpack.c.0.s8 %v544
    %v546 = vlaneseq
    %v547 = vshrl.u32 %v546, 7
    %v548 = vsub.s32 %v545, %v547
    %v549 = vrot.slane %v539, %v548
    %v551 = vunpack.c.l.s4 1966171168
    %v552 = vunpack.c.0.s8 %v551
    %v553 = vlaneseq
    %v554 = vshrl.u32 %v553, 7
    %v555 = vsub.s32 %v552, %v554
    %v556 = vrot.slane %v540, %v555
    %v558 = vunpack.c.l.s4 1966171168
    %v559 = vunpack.c.0.s8 %v558
    %v560 = vlaneseq
    %v561 = vshrl.u32 %v560, 7
    %v562 = vsub.s32 %v559, %v561
    %v563 = vrot.slane %v541, %v562
    %v565 = vunpack.c.l.s4 1966171168
    %v566 = vunpack.c.0.s8 %v565
    %v567 = vlaneseq
    %v568 = vshrl.u32 %v567, 7
    %v569 = vsub.s32 %v566, %v568
    %v570 = vrot.slane %v542, %v569
    %v571 = vcombine.low %v549, %v556
    %v572 = vcombine.low %v563, %v570
    %v574 = vunpack.c.l.s4 1966171168
    %v575 = vunpack.c.0.s8 %v574
    %v576 = vlaneseq
    %v577 = vshrl.u32 %v576, 7
    %v578 = vsub.s32 %v575, %v577
    %v579 = vrot.slane %v571, %v578
    %v581 = vunpack.c.l.s4 1966171168
    %v582 = vunpack.c.0.s8 %v581
    %v583 = vlaneseq
    %v584 = vshrl.u32 %v583, 7
    %v585 = vsub.s32 %v582, %v584
    %v586 = vrot.slane %v572, %v585
    %v587 = vcombine.low %v579, %v586
    %v589 = vunpack.c.l.s4 1966171168
    %v590 = vunpack.c.0.s8 %v589
    %v591 = vlaneseq
    %v592 = vshrl.u32 %v591, 7
    %v593 = vsub.s32 %v590, %v592
    %v594 = vrot.slane %v529, %v593
    %v596 = vunpack.c.l.s4 1966171168
    %v597 = vunpack.c.0.s8 %v596
    %v598 = vlaneseq
    %v599 = vshrl.u32 %v598, 7
    %v600 = vsub.s32 %v597, %v599
    %v601 = vrot.slane %v594, %v600
    %604 = vst [vmem:[#allocation5] sm:$0xff] %v587
    %v605 = vlaneseq
    %vm606 = vcmp.ge.s32.totalorder %v605, 0
    %vm607 = vcmp.lt.s32.totalorder %v605, 32
    %vm608 = vmand %vm606, %vm607
    %609 = vst.msk [vmem:[#allocation5 + $0x8] sm:$0x1] %vm608, %v601
    // Predicated region
    $region18: #{conv2d_1x1_sigmoid.1} parent=1 // pred_check
      _
    $region19: #{conv2d_1x1_sigmoid.1} parent=1 // pred_check_branch
      %611 = sbr.rel (0) target = $region21
    $region20: #{conv2d_1x1_sigmoid.1} parent=1 // pred_region
      %s613 = ssub.s32 144, 144
      %614 = vsyncadd [#allocation4], %s613
      %s616 = sshll.u32 [#allocation5], 4
      %s617 = int_to_ptr.vmem [resolvable:$true] %s616
      %619 = dma.vmem_to_hbm [thread:$0]  %s617, 144, %s3, [#allocation4]
    $region21: #{conv2d_1x1_sigmoid.1} parent=1 // pred_fallthru
      _
    // Predicated region
    $region22: #{conv2d_1x1_sigmoid.1} parent=1 // pred_check
      _
    $region23: #{conv2d_1x1_sigmoid.1} parent=1 // pred_check_branch
      %621 = sbr.rel (0) target = $region25
    $region24: #{conv2d_1x1_sigmoid.1} parent=1 // pred_region
      %622 = dma.done [#allocation4], 144
    $region25: #{conv2d_1x1_sigmoid.1} parent=1 // pred_fallthru
      _
    %623 = vsyncpa [#allocation3], 1
    %624 = vsyncpa [#allocation4], 1

</llo_original>
